<compile_context>
chip_gen: v7x
topology: tpu7x:2x2x1
jax: 0.10.0
libtpu: 0.0.40
codegen_flags: <defaults>
</compile_context>

<pallas_src>
import jax
import jax.numpy as jnp
from jax.experimental import pallas as pl
from jax.experimental.pallas import tpu as pltpu


def _linear_add_relu_kernel(x_ref, wt_ref, bo_ref, o_ref):
    # x_ref:  (B, 3)      SMEM f32 scalars
    # wt_ref: (3, Npad)   VMEM (pre-transposed, padded Linear weight)
    # bo_ref: (1, Npad)   VMEM (bias + other, padded)
    # o_ref:  (B, Npad)   VMEM
    B = o_ref.shape[0]
    K = wt_ref.shape[0]
    for b in range(B):                      # B is tiny & static (1 here)
        acc = bo_ref[...]                   # (1, Npad)
        for k in range(K):                  # K = 3, static unroll -> 3 VPU FMAs
            acc = acc + x_ref[b, k] * wt_ref[k:k + 1, :]
        o_ref[b:b + 1, :] = jnp.maximum(acc, 0.0)


def _round_up(n, m):
    return ((n + m - 1) // m) * m


def prepare_weight(weight):
    """One-time parameter prep: transpose (N,3)->(3,N) and pad N up to a
    multiple of 128 for lane-dense VMEM tiles."""
    n_out, _ = weight.shape
    n_pad = _round_up(n_out, 128)
    return jnp.pad(weight.T, ((0, 0), (0, n_pad - n_out)))  # (3, Npad)


def linear_add_relu(x1, wt_padded, bias, other):
    """x1: (B, 3) f32, wt_padded: (3, Npad) f32 (from prepare_weight),
    bias: (N,) f32, other: (N,) f32.  Returns (B, N) f32."""
    B = x1.shape[0]
    N = bias.shape[0]
    Npad = wt_padded.shape[1]

    # Fold bias + other into one lane-dense row vector (fuses in XLA).
    bo = jnp.pad(bias + other, (0, Npad - N)).reshape(1, Npad)

    out_padded = pl.pallas_call(
        _linear_add_relu_kernel,
        out_shape=jax.ShapeDtypeStruct((B, Npad), jnp.float32),
        in_specs=[
            pl.BlockSpec(memory_space=pltpu.MemorySpace.SMEM),  # x scalars
            pl.BlockSpec(memory_space=pltpu.MemorySpace.VMEM),  # weight^T
            pl.BlockSpec(memory_space=pltpu.MemorySpace.VMEM),  # bias+other
        ],
        out_specs=pl.BlockSpec(memory_space=pltpu.MemorySpace.VMEM),
    )(x1, wt_padded, bo)

    return out_padded[:, :N]


if __name__ == "__main__":
    key = jax.random.PRNGKey(0)
    k_x, k_w, k_b, k_o = jax.random.split(key, 4)

    in_features, out_features = 3, 1000

    # Deterministic "parameters" (torch.nn.Linear(3, 1000) shapes).
    weight = jax.random.normal(k_w, (out_features, in_features), dtype=jnp.float32) * 0.1
    bias = jax.random.normal(k_b, (out_features,), dtype=jnp.float32) * 0.1

    # Inputs consistent with the module: x1 (1, 3), other (1000,).
    x1 = jax.random.normal(k_x, (1, in_features), dtype=jnp.float32)
    other = jax.random.normal(k_o, (out_features,), dtype=jnp.float32)

    # One-time parameter prep (pre-transpose + pad), outside the call path.
    wt_padded = prepare_weight(weight)

    out = linear_add_relu(x1, wt_padded, bias, other)
    out = jax.block_until_ready(out)

    # Reference check in plain JAX.
    ref = jnp.maximum(x1 @ weight.T + bias + other, 0.0)
    assert out.shape == (1, out_features)
    assert jnp.allclose(out, ref, atol=1e-5, rtol=1e-5)

    print("KERNEL_OK")
</pallas_src>

<mosaic_0001>
module attributes {stable_mosaic.version = 11 : i64} {
  func.func @_linear_add_relu_kernel(%arg0: memref<1x3xf32, #tpu.memory_space<smem>>, %arg1: memref<3x1024xf32, #tpu.memory_space<vmem>>, %arg2: memref<1x1024xf32, #tpu.memory_space<vmem>>, %arg3: memref<1x1024xf32, #tpu.memory_space<vmem>>) attributes {dimension_semantics = [], scalar_prefetch = 0 : i64, scratch_operands = 0 : i64, tpu.core_type = #tpu.core_type<tc>} {
    %c0 = arith.constant 0 : index
    %c0_0 = arith.constant 0 : index
    %0 = vector.load %arg2[%c0, %c0_0] : memref<1x1024xf32, #tpu.memory_space<vmem>>, vector<1x1024xf32>
    %c0_1 = arith.constant 0 : index
    %c0_2 = arith.constant 0 : index
    %1 = memref.load %arg0[%c0_1, %c0_2] : memref<1x3xf32, #tpu.memory_space<smem>>
    %c0_3 = arith.constant 0 : index
    %c0_4 = arith.constant 0 : index
    %2 = vector.load %arg1[%c0_3, %c0_4] : memref<3x1024xf32, #tpu.memory_space<vmem>>, vector<1x1024xf32>
    %3 = vector.broadcast %1 : f32 to vector<1x1024xf32>
    %4 = arith.mulf %3, %2 : vector<1x1024xf32>
    %5 = arith.addf %0, %4 : vector<1x1024xf32>
    %c0_5 = arith.constant 0 : index
    %c1 = arith.constant 1 : index
    %6 = memref.load %arg0[%c0_5, %c1] : memref<1x3xf32, #tpu.memory_space<smem>>
    %c1_6 = arith.constant 1 : index
    %c0_7 = arith.constant 0 : index
    %7 = vector.load %arg1[%c1_6, %c0_7] : memref<3x1024xf32, #tpu.memory_space<vmem>>, vector<1x1024xf32>
    %8 = vector.broadcast %6 : f32 to vector<1x1024xf32>
    %9 = arith.mulf %8, %7 : vector<1x1024xf32>
    %10 = arith.addf %5, %9 : vector<1x1024xf32>
    %c0_8 = arith.constant 0 : index
    %c2 = arith.constant 2 : index
    %11 = memref.load %arg0[%c0_8, %c2] : memref<1x3xf32, #tpu.memory_space<smem>>
    %c2_9 = arith.constant 2 : index
    %c0_10 = arith.constant 0 : index
    %12 = vector.load %arg1[%c2_9, %c0_10] : memref<3x1024xf32, #tpu.memory_space<vmem>>, vector<1x1024xf32>
    %13 = vector.broadcast %11 : f32 to vector<1x1024xf32>
    %14 = arith.mulf %13, %12 : vector<1x1024xf32>
    %15 = arith.addf %10, %14 : vector<1x1024xf32>
    %cst = arith.constant 0.000000e+00 : f32
    %16 = vector.broadcast %cst : f32 to vector<1x1024xf32>
    %17 = arith.maximumf %15, %16 : vector<1x1024xf32>
    %c0_11 = arith.constant 0 : index
    %c0_12 = arith.constant 0 : index
    %18 = vector.load %arg3[%c0_11, %c0_12] : memref<1x1024xf32, #tpu.memory_space<vmem>>, vector<1x1024xf32>
    tpu.vector_store %arg3[%c0_11, %c0_12], %17 {strides = array<i32>} : memref<1x1024xf32, #tpu.memory_space<vmem>>, vector<1x1024xf32>,
    return
  }
}

</mosaic_0001>

<llo_original>
// kernel: tpu_custom_call.1
$region0: #{tpu_custom_call.1}
  #allocation0 [shape = 'u32[]', space=smem, size = 0x4, offset = 0x4, fixed_abs, tag = 'smem constant byte address 0x4 - core index']
  #allocation1 [shape = 'u32[144,128]{1,0:T(1,128)}', space=vmem, size = 0x12000, scoped, tag = 'internal scratch']
  %s0 = inlined_call_operand.hbm [shape: f32[1,3], index: 0, kind: input, shape index: {}]
  %s1 = inlined_call_operand.hbm [shape: f32[3,1024], index: 1, kind: input, shape index: {}]
  %s2 = inlined_call_operand.hbm [shape: f32[1,1024], index: 2, kind: input, shape index: {}]
  %s3 = inlined_call_operand.hbm [shape: f32[1,1024], index: 3, kind: output, shape index: {}]
  %s4 = sld [smem:[#allocation0]]
  $region34: #{tpu_custom_call.1} parent=0
    _
  %s6 = ssub.s32 1, %s4
  %s7 = scalar_select 0, %s6, %s4
  $region1: #{tpu_custom_call.1} parent=0
    #allocation2 [shape = 'u8[512]{0}', space=smem, size = 0x200, scoped, tag = 'input window, operand 0, single buffered']
    #allocation3 [shape = 's32[1]{0}', space=sflag, size = 0x4, scoped, tag = 'scoped memory for tpu_custom_call.1']
    #allocation4 [shape = 's32[1]{0}', space=sflag, size = 0x4, scoped, tag = 'scoped memory for tpu_custom_call.1']
    #allocation5 [shape = 's32[1]{0}', space=sflag, size = 0x4, scoped, tag = 'scoped memory for tpu_custom_call.1']
    #allocation6 [shape = 'u8[16384]{0}', space=vmem, size = 0x4000, scoped, tag = 'input window, operand 1, single buffered']
    #allocation7 [shape = 'u8[4096]{0}', space=vmem, size = 0x1000, scoped, tag = 'input window, operand 2, single buffered']
    #allocation8 [shape = 's32[1]{0}', space=sflag, size = 0x4, scoped, tag = 'scoped memory for tpu_custom_call.1']
    #allocation9 [shape = 'u8[4096]{0}', space=vmem, size = 0x1000, scoped, tag = 'output window, operand 0, single buffered']
    %8 = vsyncpa [#allocation5], 0
    %9 = vsyncpa [#allocation3], 0
    %10 = vsyncpa [#allocation8], 0
    %11 = vsyncpa [#allocation4], 0
    // Predicated region
    $region2: #{tpu_custom_call.1} parent=1 // pred_check
      _
    $region3: #{tpu_custom_call.1} parent=1 // pred_check_branch
      %13 = sbr.rel (0) target = $region5
    $region4: #{tpu_custom_call.1} parent=1 // pred_region
      %s15 = ssub.s32 16, 16
      %16 = vsyncadd [#allocation5], %s15
      %19 = dma.hbm_to_smem %s0, 16, [#allocation2], [#allocation5]
    $region5: #{tpu_custom_call.1} parent=1 // pred_fallthru
      _
    // Predicated region
    $region6: #{tpu_custom_call.1} parent=1 // pred_check
      _
    $region7: #{tpu_custom_call.1} parent=1 // pred_check_branch
      %21 = sbr.rel (0) target = $region9
    $region8: #{tpu_custom_call.1} parent=1 // pred_region
      %s23 = ssub.s32 512, 512
      %24 = vsyncadd [#allocation3], %s23
      %s26 = sshll.u32 [#allocation6], 4
      %s27 = int_to_ptr.vmem [resolvable:$true] %s26
      %29 = dma.hbm_to_vmem [thread:$0]  %s1, 512, %s27, [#allocation3]
    $region9: #{tpu_custom_call.1} parent=1 // pred_fallthru
      _
    // Predicated region
    $region10: #{tpu_custom_call.1} parent=1 // pred_check
      _
    $region11: #{tpu_custom_call.1} parent=1 // pred_check_branch
      %31 = sbr.rel (0) target = $region13
    $region12: #{tpu_custom_call.1} parent=1 // pred_region
      %s33 = ssub.s32 128, 128
      %34 = vsyncadd [#allocation8], %s33
      %s36 = sshll.u32 [#allocation7], 4
      %s37 = int_to_ptr.vmem [resolvable:$true] %s36
      %39 = dma.hbm_to_vmem [thread:$0]  %s2, 128, %s37, [#allocation8]
    $region13: #{tpu_custom_call.1} parent=1 // pred_fallthru
      _
    // Predicated region
    $region14: #{tpu_custom_call.1} parent=1 // pred_check
      _
    $region15: #{tpu_custom_call.1} parent=1 // pred_check_branch
      %41 = sbr.rel (0) target = $region17
    $region16: #{tpu_custom_call.1} parent=1 // pred_region
      %42 = dma.done [#allocation5], 16
    $region17: #{tpu_custom_call.1} parent=1 // pred_fallthru
      _
    // Predicated region
    $region18: #{tpu_custom_call.1} parent=1 // pred_check
      _
    $region19: #{tpu_custom_call.1} parent=1 // pred_check_branch
      %44 = sbr.rel (0) target = $region21
    $region20: #{tpu_custom_call.1} parent=1 // pred_region
      %45 = dma.done [#allocation3], 512
    $region21: #{tpu_custom_call.1} parent=1 // pred_fallthru
      _
    // Predicated region
    $region22: #{tpu_custom_call.1} parent=1 // pred_check
      _
    $region23: #{tpu_custom_call.1} parent=1 // pred_check_branch
      %47 = sbr.rel (0) target = $region25
    $region24: #{tpu_custom_call.1} parent=1 // pred_region
      %48 = dma.done [#allocation8], 128
    $region25: #{tpu_custom_call.1} parent=1 // pred_fallthru
      _
    %49 = sfence
    %v50 = vld [vmem:[#allocation7] sm:$0xff]
    %s51 = sld [smem:[#allocation2]]
    %v52 = vld [vmem:[#allocation6] ss:$4 sm:$0xff]
    %v53 = vstv %s51
    %v54 = vmul.f32 %v53, %v52
    %v55 = vadd.f32 %v50, %v54
    %s56 = sld [smem:[#allocation2 + $0x1]]
    %s57 = scalar_lea.vmem [#allocation6], 1
    %v58 = vld [vmem:[%s57] ss:$4 sm:$0xff]
    %v59 = vstv %s56
    %v60 = vmul.f32 %v59, %v58
    %v61 = vadd.f32 %v55, %v60
    %s62 = sld [smem:[#allocation2 + $0x2]]
    %s63 = scalar_lea.vmem [#allocation6], 2
    %v64 = vld [vmem:[%s63] ss:$4 sm:$0xff]
    %v65 = vstv %s62
    %v66 = vmul.f32 %v65, %v64
    %v67 = vadd.f32 %v61, %v66
    %v68 = vmax.f32 %v67, 0.0
    %69 = vst [vmem:[#allocation9] sm:$0xff] %v68
    // Predicated region
    $region26: #{tpu_custom_call.1} parent=1 // pred_check
      _
    $region27: #{tpu_custom_call.1} parent=1 // pred_check_branch
      %71 = sbr.rel (0) target = $region29
    $region28: #{tpu_custom_call.1} parent=1 // pred_region
      %s73 = ssub.s32 128, 128
      %74 = vsyncadd [#allocation4], %s73
      %s76 = sshll.u32 [#allocation9], 4
      %s77 = int_to_ptr.vmem [resolvable:$true] %s76
      %79 = dma.vmem_to_hbm [thread:$0]  %s77, 128, %s3, [#allocation4]
    $region29: #{tpu_custom_call.1} parent=1 // pred_fallthru
      _
    // Predicated region
    $region30: #{tpu_custom_call.1} parent=1 // pred_check
      _
    $region31: #{tpu_custom_call.1} parent=1 // pred_check_branch
      %81 = sbr.rel (0) target = $region33
    $region32: #{tpu_custom_call.1} parent=1 // pred_region
      %82 = dma.done [#allocation4], 128
    $region33: #{tpu_custom_call.1} parent=1 // pred_fallthru
      _
    %83 = vsyncpa [#allocation3], 1
    %84 = vsyncpa [#allocation8], 1
    %85 = vsyncpa [#allocation4], 1
    %86 = vsyncpa [#allocation5], 1

</llo_original>
